<compile_context>
chip_gen: v7x
topology: tpu7x:2x2x1
jax: 0.10.0
libtpu: 0.0.40
codegen_flags: <defaults>
</compile_context>

<pallas_src>
import functools

import jax
import jax.numpy as jnp
from jax.experimental import pallas as pl
from jax.experimental.pallas import tpu as pltpu

_LANE = 128        # vreg lane width  -> every feature axis padded to this
_ROW_GRAIN = 16    # bf16 sublane grain -> batch tiles rounded to this


def _round_up(x, m):
    return ((x + m - 1) // m) * m


def _pick_tile(dim_pad, max_tile):
    """Largest multiple of 128 that divides dim_pad and is <= max_tile."""
    t = max(_LANE, (min(dim_pad, max_tile) // _LANE) * _LANE)
    while dim_pad % t != 0:
        t -= _LANE
    return t


def _tpu_info():
    """(physical VMEM bytes per core, #TensorCores per device, bf16 VPU/EUP?)."""
    phys_vmem = None
    num_tc = None
    kind = ""
    try:
        kind = jax.devices()[0].device_kind.lower()
    except Exception:
        pass
    try:
        info = pltpu.get_tpu_info()
        v = getattr(info, "vmem_capacity_bytes", None)
        if v:
            phys_vmem = int(v)
        for attr in ("num_cores", "num_tensorcores", "tensorcore_count", "core_count"):
            c = getattr(info, attr, None)
            if c:
                num_tc = int(c)
                break
    except Exception:
        pass
    if phys_vmem is None:
        phys_vmem = (64 if "7" in kind else 128) * 1024 * 1024
    if num_tc is None:
        num_tc = 2 if ("7" in kind or "v4" in kind or "v5p" in kind) else 1
    is_v5e = ("v5 lite" in kind) or ("v5e" in kind) or ("v5lite" in kind)
    return phys_vmem, num_tc, (not is_v5e)


# --------------------------------------------------------------------------- #
# Fused kernel: whole network resident in VMEM, tiled only over the batch.    #
# --------------------------------------------------------------------------- #
def _mlp_fused_kernel(x_ref, *refs, num_layers, nonlinearity, bf16_act):
    """refs = (w0, b0, w1, b1, ..., o_ref). w bf16, b f32, out bf16."""
    o_ref = refs[-1]
    wb = refs[:-1]
    h = x_ref[...]                                   # bf16 -> MXU directly
    for l in range(num_layers):
        w = wb[2 * l][...]                           # bf16 (in_pad, out_pad)
        b = wb[2 * l + 1][...]                       # f32  (1, out_pad)
        acc = jnp.dot(h, w, preferred_element_type=jnp.float32) + b
        if l < num_layers - 1:
            # normalization = Identity, dropout p=0.0 -> no-ops
            if bf16_act:                             # v6e/v7x: bf16 VPU/EUP path
                h = acc.astype(jnp.bfloat16)
                if nonlinearity == "ReLU":
                    h = jnp.maximum(h, 0.0)
                elif nonlinearity == "Tanh":
                    h = jnp.tanh(h)
            else:                                    # v5e: f32 VPU/EUP only
                if nonlinearity == "ReLU":
                    acc = jnp.maximum(acc, 0.0)
                elif nonlinearity == "Tanh":
                    acc = jnp.tanh(acc)
                h = acc.astype(jnp.bfloat16)
        else:
            o_ref[...] = acc.astype(o_ref.dtype)


# --------------------------------------------------------------------------- #
# Layerwise fallback: K/N-tiled matmul with f32 accumulator (streams weights). #
# --------------------------------------------------------------------------- #
def _layer_kernel(x_ref, w_ref, b_ref, o_ref, acc_ref, *,
                  apply_act, nonlinearity, bf16_act):
    k = pl.program_id(2)

    @pl.when(k == 0)
    def _():
        acc_ref[...] = jnp.zeros_like(acc_ref)

    acc_ref[...] += jnp.dot(x_ref[...], w_ref[...],
                            preferred_element_type=jnp.float32)

    @pl.when(k == pl.num_programs(2) - 1)
    def _():
        acc = acc_ref[...] + b_ref[...]
        if apply_act and bf16_act:
            h = acc.astype(o_ref.dtype)
            if nonlinearity == "ReLU":
                h = jnp.maximum(h, 0.0)
            elif nonlinearity == "Tanh":
                h = jnp.tanh(h)
            o_ref[...] = h
        else:
            if apply_act:
                if nonlinearity == "ReLU":
                    acc = jnp.maximum(acc, 0.0)
                elif nonlinearity == "Tanh":
                    acc = jnp.tanh(acc)
            o_ref[...] = acc.astype(o_ref.dtype)


def _layer_forward(h, wp, bp, *, apply_act, nonlinearity, bf16_act):
    B, K = h.shape
    N = wp.shape[1]
    tm = min(512, _round_up(B, _ROW_GRAIN))
    tn = _pick_tile(N, 512)
    tk = _pick_tile(K, 512)
    grid = (pl.cdiv(B, tm), N // tn, K // tk)
    kernel = functools.partial(_layer_kernel, apply_act=apply_act,
                               nonlinearity=nonlinearity, bf16_act=bf16_act)
    return pl.pallas_call(
        kernel,
        out_shape=jax.ShapeDtypeStruct((B, N), jnp.bfloat16),
        grid_spec=pltpu.PrefetchScalarGridSpec(
            num_scalar_prefetch=0,
            grid=grid,
            in_specs=[pl.BlockSpec((tm, tk), lambda i, j, k: (i, k)),
                      pl.BlockSpec((tk, tn), lambda i, j, k: (k, j)),
                      pl.BlockSpec((1, tn), lambda i, j, k: (0, j))],
            out_specs=pl.BlockSpec((tm, tn), lambda i, j, k: (i, j)),
            scratch_shapes=[pltpu.VMEM((tm, tn), jnp.float32)],
        ),
        compiler_params=pltpu.CompilerParams(
            dimension_semantics=("parallel", "parallel", "arbitrary")),
    )(h, wp, bp)


# --------------------------------------------------------------------------- #
# Wrapper                                                                     #
# --------------------------------------------------------------------------- #
def mlp_forward(x, weights_t, biases, nonlinearity="Identity",
                block_batch=1024, force_layerwise=False):
    """x: (B, feature_size); weights_t: list of (in_l, out_l); biases: list of (out_l,)."""
    B, F = x.shape
    num_layers = len(weights_t)
    out_dim = weights_t[-1].shape[1]

    phys_vmem, num_tc, bf16_act = _tpu_info()
    vmem_cap = int(0.85 * phys_vmem)              # headroom below physical VMEM

    # ---- pad every feature axis to the 128-lane grain (zero fill is exact) ----
    dims = [F] + [w.shape[1] for w in weights_t]
    dims_p = [_round_up(d, _LANE) for d in dims]
    out_pad = dims_p[-1]

    x_p = jnp.pad(x, ((0, 0), (0, dims_p[0] - F))).astype(jnp.bfloat16)
    w_p, b_p = [], []
    for l, (w, b) in enumerate(zip(weights_t, biases)):
        in_p, o_p = dims_p[l], dims_p[l + 1]
        w_p.append(jnp.pad(w, ((0, in_p - w.shape[0]),
                               (0, o_p - w.shape[1]))).astype(jnp.bfloat16))
        b_p.append(jnp.pad(b, (0, o_p - b.shape[0])).astype(jnp.float32).reshape(1, o_p))

    w_bytes = sum(w.size * 2 for w in w_p)        # bf16 weights
    b_bytes = sum(b.size * 4 for b in b_p)        # f32 biases
    max_dim = max(dims_p)

    def fused_budget(t, param_factor=1):
        io = 2 * t * dims_p[0] * 2 + 2 * t * out_pad * 2   # double-buffered bf16 x/out tiles
        act = t * max_dim * (4 + 2)                        # live f32 acc + bf16 h
        return param_factor * (w_bytes + b_bytes) + io + act

    # ---- batch tile: as big as VMEM allows; only split the grid for megacore ----
    tb = min(block_batch, _round_up(B, _ROW_GRAIN))
    if num_tc >= 2 and B > _ROW_GRAIN and pl.cdiv(B, tb) < num_tc:
        tb = _round_up(pl.cdiv(B, num_tc), _ROW_GRAIN)
    while tb > _ROW_GRAIN and fused_budget(tb) > vmem_cap:
        tb = max(_ROW_GRAIN, _round_up(tb // 2, _ROW_GRAIN))

    fused_fits = (not force_layerwise
                  and fused_budget(tb) <= vmem_cap
                  and (w_bytes + b_bytes) <= vmem_cap // 2)

    if not fused_fits:
        # Weights do not fit resident in VMEM (or forced): stream them through a
        # K/N-tiled per-layer matmul pipeline instead of collapsing the batch tile.
        h = x_p
        for l in range(num_layers):
            h = _layer_forward(h, w_p[l], b_p[l],
                               apply_act=(l < num_layers - 1),
                               nonlinearity=nonlinearity, bf16_act=bf16_act)
        return h[:, :out_dim].astype(x.dtype)

    grid = (pl.cdiv(B, tb),)
    kernel = functools.partial(_mlp_fused_kernel, num_layers=num_layers,
                               nonlinearity=nonlinearity, bf16_act=bf16_act)
    flops = 2 * B * sum(a * b for a, b in zip(dims_p[:-1], dims_p[1:]))
    transcendentals = B * sum(dims_p[1:-1]) if nonlinearity == "Tanh" else 0
    bytes_accessed = x_p.size * 2 + w_bytes + b_bytes + B * out_pad * 2

    def call(single_buffer_params):
        pmode = {"pipeline_mode": pl.Buffered(1)} if single_buffer_params else {}
        in_specs = [pl.BlockSpec((tb, dims_p[0]), lambda i: (i, 0))]
        flat_params = []
        for wp, bp in zip(w_p, b_p):
            # Constant block index across the grid -> fetched once, then revisited.
            in_specs.append(pl.BlockSpec(wp.shape, lambda i: (0, 0), **pmode))
            in_specs.append(pl.BlockSpec(bp.shape, lambda i: (0, 0), **pmode))
            flat_params += [wp, bp]
        budget = fused_budget(tb, param_factor=1 if single_buffer_params else 2)
        vmem_limit = int(min(vmem_cap, max(24 * 1024 * 1024,
                                           budget + 2 * 1024 * 1024)))
        return pl.pallas_call(
            kernel,
            out_shape=jax.ShapeDtypeStruct((B, out_pad), jnp.bfloat16),
            grid_spec=pltpu.PrefetchScalarGridSpec(
                num_scalar_prefetch=0,
                grid=grid,
                in_specs=in_specs,
                out_specs=pl.BlockSpec((tb, out_pad), lambda i: (i, 0)),
            ),
            compiler_params=pltpu.CompilerParams(
                dimension_semantics=("parallel",),
                vmem_limit_bytes=vmem_limit,
            ),
            cost_estimate=pl.CostEstimate(
                flops=flops, transcendentals=transcendentals,
                bytes_accessed=bytes_accessed),
        )(x_p, *flat_params)

    try:
        out_padded = jax.block_until_ready(call(True))
    except Exception:
        # pipeline_mode=pl.Buffered(1) unsupported on this jax -> default specs.
        out_padded = call(False)

    # Strip the lane padding of the output layer.
    return out_padded[:, :out_dim].astype(x.dtype)


# --------------------------------------------------------------------------- #
# Params / reference                                                           #
# --------------------------------------------------------------------------- #
def init_mlp_params(key, feature_size, hidden_layer_sizes, num_targets):
    """PyTorch nn.Linear-style init: U(-1/sqrt(fan_in), 1/sqrt(fan_in)).
    Weights already transposed to (in, out)."""
    sizes = [feature_size] + list(hidden_layer_sizes) + [num_targets]
    weights_t, biases = [], []
    for fan_in, fan_out in zip(sizes[:-1], sizes[1:]):
        key, kw, kb = jax.random.split(key, 3)
        bound = 1.0 / (fan_in ** 0.5)
        weights_t.append(jax.random.uniform(kw, (fan_in, fan_out), jnp.float32,
                                            minval=-bound, maxval=bound))
        biases.append(jax.random.uniform(kb, (fan_out,), jnp.float32,
                                         minval=-bound, maxval=bound))
    return weights_t, biases


def mlp_reference(x, weights_t, biases, nonlinearity="Identity", bf16_act=True):
    """Pure-JAX reference mirroring the kernel numerics (bf16 MXU, f32 acc, bf16 out)."""
    h = x.astype(jnp.bfloat16)
    n = len(weights_t)
    out = None
    for l, (w, b) in enumerate(zip(weights_t, biases)):
        acc = jnp.dot(h, w.astype(jnp.bfloat16),
                      preferred_element_type=jnp.float32) + b.astype(jnp.float32)
        if l < n - 1:
            if bf16_act:
                h = acc.astype(jnp.bfloat16)
                if nonlinearity == "ReLU":
                    h = jnp.maximum(h, 0.0)
                elif nonlinearity == "Tanh":
                    h = jnp.tanh(h)
            else:
                if nonlinearity == "ReLU":
                    acc = jnp.maximum(acc, 0.0)
                elif nonlinearity == "Tanh":
                    acc = jnp.tanh(acc)
                h = acc.astype(jnp.bfloat16)
        else:
            out = acc.astype(jnp.bfloat16)
    return out.astype(x.dtype)


if __name__ == "__main__":
    batch = 64
    feature_size = 16
    hidden_layer_sizes = [32, 32]
    num_targets = 8
    nonlinearity = "ReLU"   # module arg; default 'Identity' also supported

    key = jax.random.PRNGKey(0)
    key, kx = jax.random.split(key)
    x = jax.random.normal(kx, (batch, feature_size), jnp.float32)
    weights_t, biases = init_mlp_params(key, feature_size, hidden_layer_sizes, num_targets)

    _, _, bf16_act = _tpu_info()
    ref = mlp_reference(x, weights_t, biases, nonlinearity=nonlinearity, bf16_act=bf16_act)

    # Fused (weights-resident) path.
    out = jax.block_until_ready(
        mlp_forward(x, weights_t, biases, nonlinearity=nonlinearity))
    assert out.shape == (batch, num_targets)
    assert jnp.allclose(out, ref, atol=2e-2, rtol=2e-2), "fused kernel mismatch vs reference"

    # Layerwise streamed-weight fallback path (used when weights exceed VMEM).
    out_lw = jax.block_until_ready(
        mlp_forward(x, weights_t, biases, nonlinearity=nonlinearity, force_layerwise=True))
    assert out_lw.shape == (batch, num_targets)
    assert jnp.allclose(out_lw, ref, atol=2e-2, rtol=2e-2), "layerwise kernel mismatch vs reference"

    print("KERNEL_OK")
</pallas_src>

<mosaic_0001>
module attributes {stable_mosaic.version = 11 : i64} {
  func.func @_mlp_fused_kernel(%arg0: i32, %arg1: memref<64x128xbf16, #tpu.memory_space<vmem>>, %arg2: memref<128x128xbf16, #tpu.memory_space<vmem>>, %arg3: memref<1x128xf32, #tpu.memory_space<vmem>>, %arg4: memref<128x128xbf16, #tpu.memory_space<vmem>>, %arg5: memref<1x128xf32, #tpu.memory_space<vmem>>, %arg6: memref<128x128xbf16, #tpu.memory_space<vmem>>, %arg7: memref<1x128xf32, #tpu.memory_space<vmem>>, %arg8: memref<64x128xbf16, #tpu.memory_space<vmem>>) attributes {dimension_semantics = [#tpu.dimension_semantics<parallel>], iteration_bounds = array<i64: 1>, scalar_prefetch = 0 : i64, scratch_operands = 0 : i64, tpu.core_type = #tpu.core_type<tc>, window_params = [{transform_indices = @transform_0, window_bounds = array<i64: 64, 128>}, {pipeline_mode = #tpu.pipeline_mode<synchronous>, transform_indices = @transform_1, window_bounds = array<i64: 128, 128>}, {pipeline_mode = #tpu.pipeline_mode<synchronous>, transform_indices = @transform_2, window_bounds = array<i64: 1, 128>}, {pipeline_mode = #tpu.pipeline_mode<synchronous>, transform_indices = @transform_3, window_bounds = array<i64: 128, 128>}, {pipeline_mode = #tpu.pipeline_mode<synchronous>, transform_indices = @transform_4, window_bounds = array<i64: 1, 128>}, {pipeline_mode = #tpu.pipeline_mode<synchronous>, transform_indices = @transform_5, window_bounds = array<i64: 128, 128>}, {pipeline_mode = #tpu.pipeline_mode<synchronous>, transform_indices = @transform_6, window_bounds = array<i64: 1, 128>}, {transform_indices = @transform_7, window_bounds = array<i64: 64, 128>}]} {
    %c0 = arith.constant 0 : index
    %c0_0 = arith.constant 0 : index
    %0 = vector.load %arg1[%c0, %c0_0] : memref<64x128xbf16, #tpu.memory_space<vmem>>, vector<64x128xbf16>
    %c0_1 = arith.constant 0 : index
    %c0_2 = arith.constant 0 : index
    %1 = vector.load %arg2[%c0_1, %c0_2] : memref<128x128xbf16, #tpu.memory_space<vmem>>, vector<128x128xbf16>
    %c0_3 = arith.constant 0 : index
    %c0_4 = arith.constant 0 : index
    %2 = vector.load %arg3[%c0_3, %c0_4] : memref<1x128xf32, #tpu.memory_space<vmem>>, vector<1x128xf32>
    %cst = arith.constant dense<0.000000e+00> : vector<64x128xf32>
    %3 = tpu.matmul %0, %1, %cst {dimension_numbers = #tpu.dot_dimension_numbers<[1], [0], [0], [1], [0, 0, 1, 1], [], []>} : vector<64x128xbf16>, vector<128x128xbf16>, vector<64x128xf32> -> vector<64x128xf32>
    %4 = vector.broadcast %2 : vector<1x128xf32> to vector<64x128xf32>
    %5 = arith.addf %3, %4 : vector<64x128xf32>
    %6 = arith.truncf %5 : vector<64x128xf32> to vector<64x128xbf16>
    %cst_5 = arith.constant 0.000000e+00 : bf16
    %7 = vector.broadcast %cst_5 : bf16 to vector<64x128xbf16>
    %8 = arith.maximumf %6, %7 : vector<64x128xbf16>
    %c0_6 = arith.constant 0 : index
    %c0_7 = arith.constant 0 : index
    %9 = vector.load %arg4[%c0_6, %c0_7] : memref<128x128xbf16, #tpu.memory_space<vmem>>, vector<128x128xbf16>
    %c0_8 = arith.constant 0 : index
    %c0_9 = arith.constant 0 : index
    %10 = vector.load %arg5[%c0_8, %c0_9] : memref<1x128xf32, #tpu.memory_space<vmem>>, vector<1x128xf32>
    %cst_10 = arith.constant dense<0.000000e+00> : vector<64x128xf32>
    %11 = tpu.matmul %8, %9, %cst_10 {dimension_numbers = #tpu.dot_dimension_numbers<[1], [0], [0], [1], [0, 0, 1, 1], [], []>} : vector<64x128xbf16>, vector<128x128xbf16>, vector<64x128xf32> -> vector<64x128xf32>
    %12 = vector.broadcast %10 : vector<1x128xf32> to vector<64x128xf32>
    %13 = arith.addf %11, %12 : vector<64x128xf32>
    %14 = arith.truncf %13 : vector<64x128xf32> to vector<64x128xbf16>
    %cst_11 = arith.constant 0.000000e+00 : bf16
    %15 = vector.broadcast %cst_11 : bf16 to vector<64x128xbf16>
    %16 = arith.maximumf %14, %15 : vector<64x128xbf16>
    %c0_12 = arith.constant 0 : index
    %c0_13 = arith.constant 0 : index
    %17 = vector.load %arg6[%c0_12, %c0_13] : memref<128x128xbf16, #tpu.memory_space<vmem>>, vector<128x128xbf16>
    %c0_14 = arith.constant 0 : index
    %c0_15 = arith.constant 0 : index
    %18 = vector.load %arg7[%c0_14, %c0_15] : memref<1x128xf32, #tpu.memory_space<vmem>>, vector<1x128xf32>
    %cst_16 = arith.constant dense<0.000000e+00> : vector<64x128xf32>
    %19 = tpu.matmul %16, %17, %cst_16 {dimension_numbers = #tpu.dot_dimension_numbers<[1], [0], [0], [1], [0, 0, 1, 1], [], []>} : vector<64x128xbf16>, vector<128x128xbf16>, vector<64x128xf32> -> vector<64x128xf32>
    %20 = vector.broadcast %18 : vector<1x128xf32> to vector<64x128xf32>
    %21 = arith.addf %19, %20 : vector<64x128xf32>
    %22 = arith.truncf %21 : vector<64x128xf32> to vector<64x128xbf16>
    %c0_17 = arith.constant 0 : index
    %c0_18 = arith.constant 0 : index
    %23 = vector.load %arg8[%c0_17, %c0_18] : memref<64x128xbf16, #tpu.memory_space<vmem>>, vector<64x128xbf16>
    tpu.vector_store %arg8[%c0_17, %c0_18], %22 {strides = array<i32>} : memref<64x128xbf16, #tpu.memory_space<vmem>>, vector<64x128xbf16>,
    return
  }
  func.func @transform_0(%arg0: i32) -> (i32, i32) {
    %c0_i32 = arith.constant 0 : i32
    %c0_i32_0 = arith.constant 0 : i32
    return %arg0, %c0_i32 : i32, i32
  }
  func.func @transform_1(%arg0: i32) -> (i32, i32) {
    %c0_i32 = arith.constant 0 : i32
    %c0_i32_0 = arith.constant 0 : i32
    %c0_i32_1 = arith.constant 0 : i32
    return %c0_i32, %c0_i32_0 : i32, i32
  }
  func.func @transform_2(%arg0: i32) -> (i32, i32) {
    %c0_i32 = arith.constant 0 : i32
    %c0_i32_0 = arith.constant 0 : i32
    %c0_i32_1 = arith.constant 0 : i32
    return %c0_i32, %c0_i32_0 : i32, i32
  }
  func.func @transform_3(%arg0: i32) -> (i32, i32) {
    %c0_i32 = arith.constant 0 : i32
    %c0_i32_0 = arith.constant 0 : i32
    %c0_i32_1 = arith.constant 0 : i32
    return %c0_i32, %c0_i32_0 : i32, i32
  }
  func.func @transform_4(%arg0: i32) -> (i32, i32) {
    %c0_i32 = arith.constant 0 : i32
    %c0_i32_0 = arith.constant 0 : i32
    %c0_i32_1 = arith.constant 0 : i32
    return %c0_i32, %c0_i32_0 : i32, i32
  }
  func.func @transform_5(%arg0: i32) -> (i32, i32) {
    %c0_i32 = arith.constant 0 : i32
    %c0_i32_0 = arith.constant 0 : i32
    %c0_i32_1 = arith.constant 0 : i32
    return %c0_i32, %c0_i32_0 : i32, i32
  }
  func.func @transform_6(%arg0: i32) -> (i32, i32) {
    %c0_i32 = arith.constant 0 : i32
    %c0_i32_0 = arith.constant 0 : i32
    %c0_i32_1 = arith.constant 0 : i32
    return %c0_i32, %c0_i32_0 : i32, i32
  }
  func.func @transform_7(%arg0: i32) -> (i32, i32) {
    %c0_i32 = arith.constant 0 : i32
    %c0_i32_0 = arith.constant 0 : i32
    return %arg0, %c0_i32 : i32, i32
  }
}

module attributes {stable_mosaic.version = 11 : i64} {
  func.func @_mlp_fused_kernel(%arg0: i32, %arg1: memref<64x128xbf16, #tpu.memory_space<vmem>>, %arg2: memref<128x128xbf16, #tpu.memory_space<vmem>>, %arg3: memref<1x128xf32, #tpu.memory_space<vmem>>, %arg4: memref<128x128xbf16, #tpu.memory_space<vmem>>, %arg5: memref<1x128xf32, #tpu.memory_space<vmem>>, %arg6: memref<128x128xbf16, #tpu.memory_space<vmem>>, %arg7: memref<1x128xf32, #tpu.memory_space<vmem>>, %arg8: memref<64x128xbf16, #tpu.memory_space<vmem>>) attributes {dimension_semantics = [#tpu.dimension_semantics<parallel>], iteration_bounds = array<i64: 1>, scalar_prefetch = 0 : i64, scratch_operands = 0 : i64, tpu.core_type = #tpu.core_type<tc>, window_params = [{transform_indices = @transform_0, window_bounds = array<i64: 64, 128>}, {pipeline_mode = #tpu.pipeline_mode<synchronous>, transform_indices = @transform_1, window_bounds = array<i64: 128, 128>}, {pipeline_mode = #tpu.pipeline_mode<synchronous>, transform_indices = @transform_2, window_bounds = array<i64: 1, 128>}, {pipeline_mode = #tpu.pipeline_mode<synchronous>, transform_indices = @transform_3, window_bounds = array<i64: 128, 128>}, {pipeline_mode = #tpu.pipeline_mode<synchronous>, transform_indices = @transform_4, window_bounds = array<i64: 1, 128>}, {pipeline_mode = #tpu.pipeline_mode<synchronous>, transform_indices = @transform_5, window_bounds = array<i64: 128, 128>}, {pipeline_mode = #tpu.pipeline_mode<synchronous>, transform_indices = @transform_6, window_bounds = array<i64: 1, 128>}, {transform_indices = @transform_7, window_bounds = array<i64: 64, 128>}]} {
    %c0 = arith.constant 0 : index
    %c0_0 = arith.constant 0 : index
    %0 = vector.load %arg1[%c0, %c0_0] : memref<64x128xbf16, #tpu.memory_space<vmem>>, vector<64x128xbf16>
    %c0_1 = arith.constant 0 : index
    %c0_2 = arith.constant 0 : index
    %1 = vector.load %arg2[%c0_1, %c0_2] : memref<128x128xbf16, #tpu.memory_space<vmem>>, vector<128x128xbf16>
    %c0_3 = arith.constant 0 : index
    %c0_4 = arith.constant 0 : index
    %2 = vector.load %arg3[%c0_3, %c0_4] : memref<1x128xf32, #tpu.memory_space<vmem>>, vector<1x128xf32>
    %cst = arith.constant dense<0.000000e+00> : vector<64x128xf32>
    %3 = tpu.matmul %0, %1, %cst {dimension_numbers = #tpu.dot_dimension_numbers<[1], [0], [0], [1], [0, 0, 1, 1], [], []>} : vector<64x128xbf16>, vector<128x128xbf16>, vector<64x128xf32> -> vector<64x128xf32>
    %4 = vector.broadcast %2 : vector<1x128xf32> to vector<64x128xf32>
    %5 = arith.addf %3, %4 : vector<64x128xf32>
    %6 = arith.truncf %5 : vector<64x128xf32> to vector<64x128xbf16>
    %cst_5 = arith.constant 0.000000e+00 : bf16
    %7 = vector.broadcast %cst_5 : bf16 to vector<64x128xbf16>
    %8 = arith.maximumf %6, %7 : vector<64x128xbf16>
    %c0_6 = arith.constant 0 : index
    %c0_7 = arith.constant 0 : index
    %9 = vector.load %arg4[%c0_6, %c0_7] : memref<128x128xbf16, #tpu.memory_space<vmem>>, vector<128x128xbf16>
    %c0_8 = arith.constant 0 : index
    %c0_9 = arith.constant 0 : index
    %10 = vector.load %arg5[%c0_8, %c0_9] : memref<1x128xf32, #tpu.memory_space<vmem>>, vector<1x128xf32>
    %cst_10 = arith.constant dense<0.000000e+00> : vector<64x128xf32>
    %11 = tpu.matmul %8, %9, %cst_10 {dimension_numbers = #tpu.dot_dimension_numbers<[1], [0], [0], [1], [0, 0, 1, 1], [], []>} : vector<64x128xbf16>, vector<128x128xbf16>, vector<64x128xf32> -> vector<64x128xf32>
    %12 = vector.broadcast %10 : vector<1x128xf32> to vector<64x128xf32>
    %13 = arith.addf %11, %12 : vector<64x128xf32>
    %14 = arith.truncf %13 : vector<64x128xf32> to vector<64x128xbf16>
    %cst_11 = arith.constant 0.000000e+00 : bf16
    %15 = vector.broadcast %cst_11 : bf16 to vector<64x128xbf16>
    %16 = arith.maximumf %14, %15 : vector<64x128xbf16>
    %c0_12 = arith.constant 0 : index
    %c0_13 = arith.constant 0 : index
    %17 = vector.load %arg6[%c0_12, %c0_13] : memref<128x128xbf16, #tpu.memory_space<vmem>>, vector<128x128xbf16>
    %c0_14 = arith.constant 0 : index
    %c0_15 = arith.constant 0 : index
    %18 = vector.load %arg7[%c0_14, %c0_15] : memref<1x128xf32, #tpu.memory_space<vmem>>, vector<1x128xf32>
    %cst_16 = arith.constant dense<0.000000e+00> : vector<64x128xf32>
    %19 = tpu.matmul %16, %17, %cst_16 {dimension_numbers = #tpu.dot_dimension_numbers<[1], [0], [0], [1], [0, 0, 1, 1], [], []>} : vector<64x128xbf16>, vector<128x128xbf16>, vector<64x128xf32> -> vector<64x128xf32>
    %20 = vector.broadcast %18 : vector<1x128xf32> to vector<64x128xf32>
    %21 = arith.addf %19, %20 : vector<64x128xf32>
    %22 = arith.truncf %21 : vector<64x128xf32> to vector<64x128xbf16>
    %c0_17 = arith.constant 0 : index
    %c0_18 = arith.constant 0 : index
    %23 = vector.load %arg8[%c0_17, %c0_18] : memref<64x128xbf16, #tpu.memory_space<vmem>>, vector<64x128xbf16>
    tpu.vector_store %arg8[%c0_17, %c0_18], %22 {strides = array<i32>} : memref<64x128xbf16, #tpu.memory_space<vmem>>, vector<64x128xbf16>,
    return
  }
  func.func @transform_0(%arg0: i32) -> (i32, i32) {
    %c0_i32 = arith.constant 0 : i32
    %c0_i32_0 = arith.constant 0 : i32
    return %arg0, %c0_i32 : i32, i32
  }
  func.func @transform_1(%arg0: i32) -> (i32, i32) {
    %c0_i32 = arith.constant 0 : i32
    %c0_i32_0 = arith.constant 0 : i32
    %c0_i32_1 = arith.constant 0 : i32
    return %c0_i32, %c0_i32_0 : i32, i32
  }
  func.func @transform_2(%arg0: i32) -> (i32, i32) {
    %c0_i32 = arith.constant 0 : i32
    %c0_i32_0 = arith.constant 0 : i32
    %c0_i32_1 = arith.constant 0 : i32
    return %c0_i32, %c0_i32_0 : i32, i32
  }
  func.func @transform_3(%arg0: i32) -> (i32, i32) {
    %c0_i32 = arith.constant 0 : i32
    %c0_i32_0 = arith.constant 0 : i32
    %c0_i32_1 = arith.constant 0 : i32
    return %c0_i32, %c0_i32_0 : i32, i32
  }
  func.func @transform_4(%arg0: i32) -> (i32, i32) {
    %c0_i32 = arith.constant 0 : i32
    %c0_i32_0 = arith.constant 0 : i32
    %c0_i32_1 = arith.constant 0 : i32
    return %c0_i32, %c0_i32_0 : i32, i32
  }
  func.func @transform_5(%arg0: i32) -> (i32, i32) {
    %c0_i32 = arith.constant 0 : i32
    %c0_i32_0 = arith.constant 0 : i32
    %c0_i32_1 = arith.constant 0 : i32
    return %c0_i32, %c0_i32_0 : i32, i32
  }
  func.func @transform_6(%arg0: i32) -> (i32, i32) {
    %c0_i32 = arith.constant 0 : i32
    %c0_i32_0 = arith.constant 0 : i32
    %c0_i32_1 = arith.constant 0 : i32
    return %c0_i32, %c0_i32_0 : i32, i32
  }
  func.func @transform_7(%arg0: i32) -> (i32, i32) {
    %c0_i32 = arith.constant 0 : i32
    %c0_i32_0 = arith.constant 0 : i32
    return %arg0, %c0_i32 : i32, i32
  }
}

</mosaic_0001>

<llo_original>
// kernel: tpu_custom_call.1
$region0: #{tpu_custom_call.1}
  #allocation0 [shape = 'u32[]', space=smem, size = 0x4, offset = 0x4, fixed_abs, tag = 'smem constant byte address 0x4 - core index']
  #allocation1 [shape = 'u32[144,128]{1,0:T(1,128)}', space=vmem, size = 0x12000, scoped, tag = 'internal scratch']
  %s0 = inlined_call_operand.hbm [shape: bf16[64,128], index: 0, kind: input, shape index: {}]
  %s1 = inlined_call_operand.hbm [shape: bf16[128,128], index: 1, kind: input, shape index: {}]
  %s2 = inlined_call_operand.vmem [shape: f32[1,128], index: 2, kind: input, shape index: {}]
  %s3 = inlined_call_operand.hbm [shape: bf16[128,128], index: 3, kind: input, shape index: {}]
  %s4 = inlined_call_operand.vmem [shape: f32[1,128], index: 4, kind: input, shape index: {}]
  %s5 = inlined_call_operand.hbm [shape: bf16[128,128], index: 5, kind: input, shape index: {}]
  %s6 = inlined_call_operand.vmem [shape: f32[1,128], index: 6, kind: input, shape index: {}]
  %s7 = inlined_call_operand.hbm [shape: bf16[64,128], index: 7, kind: output, shape index: {}]
  %s8 = sld [smem:[#allocation0]]
  $region54: #{tpu_custom_call.1} parent=0
    _
  %s10 = ssub.s32 1, %s8
  %s11 = scalar_select 0, %s10, %s8
  $region1: #{tpu_custom_call.1} parent=0
    #allocation2 [shape = 'u8[16384]{0}', space=vmem, size = 0x4000, scoped, tag = 'input window, operand 0, single buffered']
    #allocation3 [shape = 's32[1]{0}', space=sflag, size = 0x4, scoped, tag = 'scoped memory for tpu_custom_call.1']
    #allocation4 [shape = 's32[1]{0}', space=sflag, size = 0x4, scoped, tag = 'scoped memory for tpu_custom_call.1']
    #allocation5 [shape = 'u8[32768]{0}', space=vmem, size = 0x8000, scoped, tag = 'input window, operand 1, single buffered']
    #allocation6 [shape = 's32[1]{0}', space=sflag, size = 0x4, scoped, tag = 'scoped memory for tpu_custom_call.1']
    #allocation7 [shape = 'u8[32768]{0}', space=vmem, size = 0x8000, scoped, tag = 'input window, operand 3, single buffered']
    #allocation8 [shape = 'u8[32768]{0}', space=vmem, size = 0x8000, scoped, tag = 'input window, operand 5, single buffered']
    #allocation9 [shape = 's32[1]{0}', space=sflag, size = 0x4, scoped, tag = 'scoped memory for tpu_custom_call.1']
    #allocation10 [shape = 'u8[16384]{0}', space=vmem, size = 0x4000, scoped, tag = 'output window, operand 0, single buffered']
    %12 = vsyncpa [#allocation3], 0
    %13 = vsyncpa [#allocation6], 0
    %14 = vsyncpa [#allocation9], 0
    %15 = vsyncpa [#allocation4], 0
    // Predicated region
    $region2: #{tpu_custom_call.1} parent=1 // pred_check
      _
    $region3: #{tpu_custom_call.1} parent=1 // pred_check_branch
      %17 = sbr.rel (0) target = $region5
    $region4: #{tpu_custom_call.1} parent=1 // pred_region
      %s19 = ssub.s32 512, 512
      %20 = vsyncadd [#allocation3], %s19
      %s21 = sshll.u32 [#allocation2], 4
      %s22 = int_to_ptr.vmem [resolvable:$true] %s21
      %27 = dma.hbm_to_vmem [thread:$0]  %s0, 512, %s22, [#allocation3], 64, 64, 4
    $region5: #{tpu_custom_call.1} parent=1 // pred_fallthru
      _
    // Predicated region
    $region6: #{tpu_custom_call.1} parent=1 // pred_check
      _
    $region7: #{tpu_custom_call.1} parent=1 // pred_check_branch
      %29 = sbr.rel (0) target = $region9
    $region8: #{tpu_custom_call.1} parent=1 // pred_region
      %s31 = ssub.s32 1024, 1024
      %32 = vsyncadd [#allocation6], %s31
      %s33 = sshll.u32 [#allocation5], 4
      %s34 = int_to_ptr.vmem [resolvable:$true] %s33
      %39 = dma.hbm_to_vmem [thread:$0]  %s1, 1024, %s34, [#allocation6], 64, 64, 4
    $region9: #{tpu_custom_call.1} parent=1 // pred_fallthru
      _
    // Predicated region
    $region10: #{tpu_custom_call.1} parent=1 // pred_check
      _
    $region11: #{tpu_custom_call.1} parent=1 // pred_check_branch
      %41 = sbr.rel (0) target = $region13
    $region12: #{tpu_custom_call.1} parent=1 // pred_region
      _
    $region13: #{tpu_custom_call.1} parent=1 // pred_fallthru
      _
    // Predicated region
    $region14: #{tpu_custom_call.1} parent=1 // pred_check
      _
    $region15: #{tpu_custom_call.1} parent=1 // pred_check_branch
      %43 = sbr.rel (0) target = $region17
    $region16: #{tpu_custom_call.1} parent=1 // pred_region
      %s45 = ssub.s32 1024, 1024
      %46 = vsyncadd [#allocation6], %s45
      %s47 = sshll.u32 [#allocation7], 4
      %s48 = int_to_ptr.vmem [resolvable:$true] %s47
      %53 = dma.hbm_to_vmem [thread:$0]  %s3, 1024, %s48, [#allocation6], 64, 64, 4
    $region17: #{tpu_custom_call.1} parent=1 // pred_fallthru
      _
    // Predicated region
    $region18: #{tpu_custom_call.1} parent=1 // pred_check
      _
    $region19: #{tpu_custom_call.1} parent=1 // pred_check_branch
      %55 = sbr.rel (0) target = $region21
    $region20: #{tpu_custom_call.1} parent=1 // pred_region
      _
    $region21: #{tpu_custom_call.1} parent=1 // pred_fallthru
      _
    // Predicated region
    $region22: #{tpu_custom_call.1} parent=1 // pred_check
      _
    $region23: #{tpu_custom_call.1} parent=1 // pred_check_branch
      %57 = sbr.rel (0) target = $region25
    $region24: #{tpu_custom_call.1} parent=1 // pred_region
      %s59 = ssub.s32 1024, 1024
      %60 = vsyncadd [#allocation9], %s59
      %s61 = sshll.u32 [#allocation8], 4
      %s62 = int_to_ptr.vmem [resolvable:$true] %s61
      %67 = dma.hbm_to_vmem [thread:$0]  %s5, 1024, %s62, [#allocation9], 64, 64, 4
    $region25: #{tpu_custom_call.1} parent=1 // pred_fallthru
      _
    // Predicated region
    $region26: #{tpu_custom_call.1} parent=1 // pred_check
      _
    $region27: #{tpu_custom_call.1} parent=1 // pred_check_branch
      %69 = sbr.rel (0) target = $region29
    $region28: #{tpu_custom_call.1} parent=1 // pred_region
      _
    $region29: #{tpu_custom_call.1} parent=1 // pred_fallthru
      _
    // Predicated region
    $region30: #{tpu_custom_call.1} parent=1 // pred_check
      _
    $region31: #{tpu_custom_call.1} parent=1 // pred_check_branch
      %71 = sbr.rel (0) target = $region33
    $region32: #{tpu_custom_call.1} parent=1 // pred_region
      %72 = dma.done [#allocation3], 512
    $region33: #{tpu_custom_call.1} parent=1 // pred_fallthru
      _
    // Predicated region
    $region34: #{tpu_custom_call.1} parent=1 // pred_check
      _
    $region35: #{tpu_custom_call.1} parent=1 // pred_check_branch
      %74 = sbr.rel (0) target = $region37
    $region36: #{tpu_custom_call.1} parent=1 // pred_region
      %75 = dma.done [#allocation6], 1024
    $region37: #{tpu_custom_call.1} parent=1 // pred_fallthru
      _
    // Predicated region
    $region38: #{tpu_custom_call.1} parent=1 // pred_check
      _
    $region39: #{tpu_custom_call.1} parent=1 // pred_check_branch
      %77 = sbr.rel (0) target = $region41
    $region40: #{tpu_custom_call.1} parent=1 // pred_region
      %78 = dma.done [#allocation6], 1024
    $region41: #{tpu_custom_call.1} parent=1 // pred_fallthru
      _
    // Predicated region
    $region42: #{tpu_custom_call.1} parent=1 // pred_check
      _
    $region43: #{tpu_custom_call.1} parent=1 // pred_check_branch
      %80 = sbr.rel (0) target = $region45
    $region44: #{tpu_custom_call.1} parent=1 // pred_region
      %81 = dma.done [#allocation9], 1024
    $region45: #{tpu_custom_call.1} parent=1 // pred_fallthru
      _
    %v83 = vld [vmem:[#allocation2] sm:$0xf]
    %v84 = vld [vmem:[#allocation2 + $0x4] sm:$0xf]
    %v85 = vld [vmem:[#allocation2 + $0x8] sm:$0xf]
    %v86 = vld [vmem:[#allocation2 + $0xc] sm:$0xf]
    %v87 = vld [vmem:[#allocation2 + $0x10] sm:$0xf]
    %v88 = vld [vmem:[#allocation2 + $0x14] sm:$0xf]
    %v89 = vld [vmem:[#allocation2 + $0x18] sm:$0xf]
    %v90 = vld [vmem:[#allocation2 + $0x1c] sm:$0xf]
    %v91 = vld [vmem:[#allocation5] sm:$0xf]
    %v92 = vld [vmem:[#allocation5 + $0x4] sm:$0xf]
    %v93 = vld [vmem:[#allocation5 + $0x8] sm:$0xf]
    %v94 = vld [vmem:[#allocation5 + $0xc] sm:$0xf]
    %v95 = vld [vmem:[#allocation5 + $0x10] sm:$0xf]
    %v96 = vld [vmem:[#allocation5 + $0x14] sm:$0xf]
    %v97 = vld [vmem:[#allocation5 + $0x18] sm:$0xf]
    %v98 = vld [vmem:[#allocation5 + $0x1c] sm:$0xf]
    %v99 = vld [vmem:[#allocation5 + $0x20] sm:$0xf]
    %v100 = vld [vmem:[#allocation5 + $0x24] sm:$0xf]
    %v101 = vld [vmem:[#allocation5 + $0x28] sm:$0xf]
    %v102 = vld [vmem:[#allocation5 + $0x2c] sm:$0xf]
    %v103 = vld [vmem:[#allocation5 + $0x30] sm:$0xf]
    %v104 = vld [vmem:[#allocation5 + $0x34] sm:$0xf]
    %v105 = vld [vmem:[#allocation5 + $0x38] sm:$0xf]
    %v106 = vld [vmem:[#allocation5 + $0x3c] sm:$0xf]
    %v107 = vld [vmem:[%s2] sm:$0x1]
    %v109 = vlaneseq
    %v110 = vshrl.u32 %v109, 7
    %v111 = vsub.s32 0, %v110
    %v112 = vrot.slane %v107, %v111
    %v122 = vunpack.c.l.b16 %v83
    %v123 = vunpack.c.l.b16 %v84
    %v124 = vunpack.c.l.b16 %v85
    %v125 = vunpack.c.l.b16 %v86
    %v126 = vunpack.c.l.b16 %v87
    %v127 = vunpack.c.l.b16 %v88
    %v128 = vunpack.c.l.b16 %v89
    %v129 = vunpack.c.l.b16 %v90
    %v130 = vpack.c.b16 %v123, %v122
    %v131 = vpack.c.b16 %v125, %v124
    %v132 = vpack.c.b16 %v127, %v126
    %v133 = vpack.c.b16 %v129, %v128
    %v154 = vunpack.c.l.b16 %v91
    %v155 = vunpack.c.l.b16 %v92
    %v156 = vunpack.c.l.b16 %v93
    %v157 = vunpack.c.l.b16 %v94
    %v158 = vunpack.c.l.b16 %v95
    %v159 = vunpack.c.l.b16 %v96
    %v160 = vunpack.c.l.b16 %v97
    %v161 = vunpack.c.l.b16 %v98
    %v162 = vunpack.c.l.b16 %v99
    %v163 = vunpack.c.l.b16 %v100
    %v164 = vunpack.c.l.b16 %v101
    %v165 = vunpack.c.l.b16 %v102
    %v166 = vunpack.c.l.b16 %v103
    %v167 = vunpack.c.l.b16 %v104
    %v168 = vunpack.c.l.b16 %v105
    %v169 = vunpack.c.l.b16 %v106
    %v170 = vpack.c.b16 %v155, %v154
    %v171 = vpack.c.b16 %v157, %v156
    %v172 = vpack.c.b16 %v159, %v158
    %v173 = vpack.c.b16 %v161, %v160
    %v174 = vpack.c.b16 %v163, %v162
    %v175 = vpack.c.b16 %v165, %v164
    %v176 = vpack.c.b16 %v167, %v166
    %v177 = vpack.c.b16 %v169, %v168
    %186 = vmatprep.subr.bf16.mxu0 0
    %187 = vmatpush1.bf16.msra.mxu0 %v170
    %188 = vmatprep.subr.bf16.mxu0 0
    %189 = vmatpush1.bf16.msra.mxu0 %v171
    %190 = vmatprep.subr.bf16.mxu0 0
    %191 = vmatpush1.bf16.msra.mxu0 %v172
    %192 = vmatprep.subr.bf16.mxu0 0
    %193 = vmatpush1.bf16.msra.mxu0 %v173
    %194 = vmatprep.subr.bf16.mxu0 0
    %195 = vmatpush1.bf16.msra.mxu0 %v174
    %196 = vmatprep.subr.bf16.mxu0 0
    %197 = vmatpush1.bf16.msra.mxu0 %v175
    %198 = vmatprep.subr.bf16.mxu0 0
    %199 = vmatpush1.bf16.msra.mxu0 %v176
    %200 = vmatprep.subr.bf16.mxu0 0
    %201 = vmatpush1.bf16.msra.mxu0 %v177
    %202 = vmatprep.subr.bf16.mxu0 0
    %203 = vmatpush1.bf16.msra.mxu0 0
    %204 = vmatprep.subr.bf16.mxu0 0
    %205 = vmatpush1.bf16.msra.mxu0 0
    %206 = vmatprep.subr.bf16.mxu0 0
    %207 = vmatpush1.bf16.msra.mxu0 0
    %208 = vmatprep.subr.bf16.mxu0 0
    %209 = vmatpush1.bf16.msra.mxu0 0
    %210 = vmatprep.subr.bf16.mxu0 0
    %211 = vmatpush1.bf16.msra.mxu0 0
    %212 = vmatprep.subr.bf16.mxu0 0
    %213 = vmatpush1.bf16.msra.mxu0 0
    %214 = vmatprep.subr.bf16.mxu0 0
    %215 = vmatpush1.bf16.msra.mxu0 0
    %216 = vmatprep.subr.bf16.mxu0 0
    %217 = vmatpush1.bf16.msra.mxu0 0
    %218 = vmatprep.mubr.bf16.mxu0 0
    %219 = vmatmul.mubr.bf16.gmra.mrb[0].mxu0 %v130
    %v220 = vpop.f32.mrb[0].mxu0
    %v221 = vadd.f32 %v112, %v220
    %v222 = vpop.f32.mrb[0].mxu0
    %v223 = vpop.f32.mrb[0].mxu0
    %v224 = vadd.f32 %v112, %v223
    %v225 = vpop.f32.mrb[0].mxu0
    %226 = vmatprep.mubr.bf16.mxu0 0
    %227 = vmatmul.mubr.bf16.gmra.mrb[0].mxu0 %v131
    %v228 = vpop.f32.mrb[0].mxu0
    %v229 = vadd.f32 %v112, %v228
    %v230 = vpop.f32.mrb[0].mxu0
    %v231 = vpop.f32.mrb[0].mxu0
    %v232 = vadd.f32 %v112, %v231
    %v233 = vpop.f32.mrb[0].mxu0
    %234 = vmatprep.mubr.bf16.mxu0 0
    %235 = vmatmul.mubr.bf16.gmra.mrb[0].mxu0 %v132
    %v236 = vpop.f32.mrb[0].mxu0
    %v237 = vadd.f32 %v112, %v236
    %v238 = vpop.f32.mrb[0].mxu0
    %v239 = vpop.f32.mrb[0].mxu0
    %v240 = vadd.f32 %v112, %v239
    %v241 = vpop.f32.mrb[0].mxu0
    %242 = vmatprep.mubr.bf16.mxu0 0
    %243 = vmatmul.mubr.bf16.gmra.mrb[0].mxu0 %v133
    %v244 = vpop.f32.mrb[0].mxu0
    %v245 = vadd.f32 %v112, %v244
    %v246 = vpop.f32.mrb[0].mxu0
    %v247 = vpop.f32.mrb[0].mxu0
    %v248 = vadd.f32 %v112, %v247
    %v249 = vpop.f32.mrb[0].mxu0
    %250 = vdwg.mxu0
    %v251 = vpack.c.bf16 %v224, %v221
    %v252 = vpack.c.bf16 %v232, %v229
    %v253 = vpack.c.bf16 %v240, %v237
    %v254 = vpack.c.bf16 %v248, %v245
    %v255 = vmax.bf16 %v251, 0
    %v256 = vmax.bf16 %v252, 0
    %v257 = vmax.bf16 %v253, 0
    %v258 = vmax.bf16 %v254, 0
    %v259 = vld [vmem:[#allocation7] sm:$0xf]
    %v260 = vld [vmem:[#allocation7 + $0x4] sm:$0xf]
    %v261 = vld [vmem:[#allocation7 + $0x8] sm:$0xf]
    %v262 = vld [vmem:[#allocation7 + $0xc] sm:$0xf]
    %v263 = vld [vmem:[#allocation7 + $0x10] sm:$0xf]
    %v264 = vld [vmem:[#allocation7 + $0x14] sm:$0xf]
    %v265 = vld [vmem:[#allocation7 + $0x18] sm:$0xf]
    %v266 = vld [vmem:[#allocation7 + $0x1c] sm:$0xf]
    %v267 = vld [vmem:[#allocation7 + $0x20] sm:$0xf]
    %v268 = vld [vmem:[#allocation7 + $0x24] sm:$0xf]
    %v269 = vld [vmem:[#allocation7 + $0x28] sm:$0xf]
    %v270 = vld [vmem:[#allocation7 + $0x2c] sm:$0xf]
    %v271 = vld [vmem:[#allocation7 + $0x30] sm:$0xf]
    %v272 = vld [vmem:[#allocation7 + $0x34] sm:$0xf]
    %v273 = vld [vmem:[#allocation7 + $0x38] sm:$0xf]
    %v274 = vld [vmem:[#allocation7 + $0x3c] sm:$0xf]
    %v275 = vld [vmem:[%s4] sm:$0x1]
    %v277 = vlaneseq
    %v278 = vshrl.u32 %v277, 7
    %v279 = vsub.s32 0, %v278
    %v280 = vrot.slane %v275, %v279
    %v298 = vunpack.c.l.b16 %v259
    %v299 = vunpack.c.l.b16 %v260
    %v300 = vunpack.c.l.b16 %v261
    %v301 = vunpack.c.l.b16 %v262
    %v302 = vunpack.c.l.b16 %v263
    %v303 = vunpack.c.l.b16 %v264
    %v304 = vunpack.c.l.b16 %v265
    %v305 = vunpack.c.l.b16 %v266
    %v306 = vunpack.c.l.b16 %v267
    %v307 = vunpack.c.l.b16 %v268
    %v308 = vunpack.c.l.b16 %v269
    %v309 = vunpack.c.l.b16 %v270
    %v310 = vunpack.c.l.b16 %v271
    %v311 = vunpack.c.l.b16 %v272
    %v312 = vunpack.c.l.b16 %v273
    %v313 = vunpack.c.l.b16 %v274
    %v314 = vpack.c.b16 %v299, %v298
    %v315 = vpack.c.b16 %v301, %v300
    %v316 = vpack.c.b16 %v303, %v302
    %v317 = vpack.c.b16 %v305, %v304
    %v318 = vpack.c.b16 %v307, %v306
    %v319 = vpack.c.b16 %v309, %v308
    %v320 = vpack.c.b16 %v311, %v310
    %v321 = vpack.c.b16 %v313, %v312
    %330 = vmatprep.subr.bf16.mxu0 0
    %331 = vmatpush1.bf16.msra.mxu0 %v314
    %332 = vmatprep.subr.bf16.mxu0 0
    %333 = vmatpush1.bf16.msra.mxu0 %v315
    %334 = vmatprep.subr.bf16.mxu0 0
    %335 = vmatpush1.bf16.msra.mxu0 %v316
    %336 = vmatprep.subr.bf16.mxu0 0
    %337 = vmatpush1.bf16.msra.mxu0 %v317
    %338 = vmatprep.subr.bf16.mxu0 0
    %339 = vmatpush1.bf16.msra.mxu0 %v318
    %340 = vmatprep.subr.bf16.mxu0 0
    %341 = vmatpush1.bf16.msra.mxu0 %v319
    %342 = vmatprep.subr.bf16.mxu0 0
    %343 = vmatpush1.bf16.msra.mxu0 %v320
    %344 = vmatprep.subr.bf16.mxu0 0
    %345 = vmatpush1.bf16.msra.mxu0 %v321
    %346 = vmatprep.subr.bf16.mxu0 0
    %347 = vmatpush1.bf16.msra.mxu0 0
    %348 = vmatprep.subr.bf16.mxu0 0
    %349 = vmatpush1.bf16.msra.mxu0 0
    %350 = vmatprep.subr.bf16.mxu0 0
    %351 = vmatpush1.bf16.msra.mxu0 0
    %352 = vmatprep.subr.bf16.mxu0 0
    %353 = vmatpush1.bf16.msra.mxu0 0
    %354 = vmatprep.subr.bf16.mxu0 0
    %355 = vmatpush1.bf16.msra.mxu0 0
    %356 = vmatprep.subr.bf16.mxu0 0
    %357 = vmatpush1.bf16.msra.mxu0 0
    %358 = vmatprep.subr.bf16.mxu0 0
    %359 = vmatpush1.bf16.msra.mxu0 0
    %360 = vmatprep.subr.bf16.mxu0 0
    %361 = vmatpush1.bf16.msra.mxu0 0
    %362 = vmatprep.mubr.bf16.mxu0 0
    %363 = vmatmul.mubr.bf16.gmra.mrb[0].mxu0 %v255
    %v364 = vpop.f32.mrb[0].mxu0
    %v365 = vadd.f32 %v280, %v364
    %v366 = vpop.f32.mrb[0].mxu0
    %v367 = vpop.f32.mrb[0].mxu0
    %v368 = vadd.f32 %v280, %v367
    %v369 = vpop.f32.mrb[0].mxu0
    %370 = vmatprep.mubr.bf16.mxu0 0
    %371 = vmatmul.mubr.bf16.gmra.mrb[0].mxu0 %v256
    %v372 = vpop.f32.mrb[0].mxu0
    %v373 = vadd.f32 %v280, %v372
    %v374 = vpop.f32.mrb[0].mxu0
    %v375 = vpop.f32.mrb[0].mxu0
    %v376 = vadd.f32 %v280, %v375
    %v377 = vpop.f32.mrb[0].mxu0
    %378 = vmatprep.mubr.bf16.mxu0 0
    %379 = vmatmul.mubr.bf16.gmra.mrb[0].mxu0 %v257
    %v380 = vpop.f32.mrb[0].mxu0
    %v381 = vadd.f32 %v280, %v380
    %v382 = vpop.f32.mrb[0].mxu0
    %v383 = vpop.f32.mrb[0].mxu0
    %v384 = vadd.f32 %v280, %v383
    %v385 = vpop.f32.mrb[0].mxu0
    %386 = vmatprep.mubr.bf16.mxu0 0
    %387 = vmatmul.mubr.bf16.gmra.mrb[0].mxu0 %v258
    %v388 = vpop.f32.mrb[0].mxu0
    %v389 = vadd.f32 %v280, %v388
    %v390 = vpop.f32.mrb[0].mxu0
    %v391 = vpop.f32.mrb[0].mxu0
    %v392 = vadd.f32 %v280, %v391
    %v393 = vpop.f32.mrb[0].mxu0
    %394 = vdwg.mxu0
    %v395 = vpack.c.bf16 %v368, %v365
    %v396 = vpack.c.bf16 %v376, %v373
    %v397 = vpack.c.bf16 %v384, %v381
    %v398 = vpack.c.bf16 %v392, %v389
    %v399 = vmax.bf16 %v395, 0
    %v400 = vmax.bf16 %v396, 0
    %v401 = vmax.bf16 %v397, 0
    %v402 = vmax.bf16 %v398, 0
    %v403 = vld [vmem:[#allocation8] sm:$0xf]
    %v404 = vld [vmem:[#allocation8 + $0x4] sm:$0xf]
    %v405 = vld [vmem:[#allocation8 + $0x8] sm:$0xf]
    %v406 = vld [vmem:[#allocation8 + $0xc] sm:$0xf]
    %v407 = vld [vmem:[#allocation8 + $0x10] sm:$0xf]
    %v408 = vld [vmem:[#allocation8 + $0x14] sm:$0xf]
    %v409 = vld [vmem:[#allocation8 + $0x18] sm:$0xf]
    %v410 = vld [vmem:[#allocation8 + $0x1c] sm:$0xf]
    %v411 = vld [vmem:[#allocation8 + $0x20] sm:$0xf]
    %v412 = vld [vmem:[#allocation8 + $0x24] sm:$0xf]
    %v413 = vld [vmem:[#allocation8 + $0x28] sm:$0xf]
    %v414 = vld [vmem:[#allocation8 + $0x2c] sm:$0xf]
    %v415 = vld [vmem:[#allocation8 + $0x30] sm:$0xf]
    %v416 = vld [vmem:[#allocation8 + $0x34] sm:$0xf]
    %v417 = vld [vmem:[#allocation8 + $0x38] sm:$0xf]
    %v418 = vld [vmem:[#allocation8 + $0x3c] sm:$0xf]
    %v419 = vld [vmem:[%s6] sm:$0x1]
    %v421 = vlaneseq
    %v422 = vshrl.u32 %v421, 7
    %v423 = vsub.s32 0, %v422
    %v424 = vrot.slane %v419, %v423
    %v442 = vunpack.c.l.b16 %v403
    %v443 = vunpack.c.l.b16 %v404
    %v444 = vunpack.c.l.b16 %v405
    %v445 = vunpack.c.l.b16 %v406
    %v446 = vunpack.c.l.b16 %v407
    %v447 = vunpack.c.l.b16 %v408
    %v448 = vunpack.c.l.b16 %v409
    %v449 = vunpack.c.l.b16 %v410
    %v450 = vunpack.c.l.b16 %v411
    %v451 = vunpack.c.l.b16 %v412
    %v452 = vunpack.c.l.b16 %v413
    %v453 = vunpack.c.l.b16 %v414
    %v454 = vunpack.c.l.b16 %v415
    %v455 = vunpack.c.l.b16 %v416
    %v456 = vunpack.c.l.b16 %v417
    %v457 = vunpack.c.l.b16 %v418
    %v458 = vpack.c.b16 %v443, %v442
    %v459 = vpack.c.b16 %v445, %v444
    %v460 = vpack.c.b16 %v447, %v446
    %v461 = vpack.c.b16 %v449, %v448
    %v462 = vpack.c.b16 %v451, %v450
    %v463 = vpack.c.b16 %v453, %v452
    %v464 = vpack.c.b16 %v455, %v454
    %v465 = vpack.c.b16 %v457, %v456
    %474 = vmatprep.subr.bf16.mxu0 0
    %475 = vmatpush1.bf16.msra.mxu0 %v458
    %476 = vmatprep.subr.bf16.mxu0 0
    %477 = vmatpush1.bf16.msra.mxu0 %v459
    %478 = vmatprep.subr.bf16.mxu0 0
    %479 = vmatpush1.bf16.msra.mxu0 %v460
    %480 = vmatprep.subr.bf16.mxu0 0
    %481 = vmatpush1.bf16.msra.mxu0 %v461
    %482 = vmatprep.subr.bf16.mxu0 0
    %483 = vmatpush1.bf16.msra.mxu0 %v462
    %484 = vmatprep.subr.bf16.mxu0 0
    %485 = vmatpush1.bf16.msra.mxu0 %v463
    %486 = vmatprep.subr.bf16.mxu0 0
    %487 = vmatpush1.bf16.msra.mxu0 %v464
    %488 = vmatprep.subr.bf16.mxu0 0
    %489 = vmatpush1.bf16.msra.mxu0 %v465
    %490 = vmatprep.subr.bf16.mxu0 0
    %491 = vmatpush1.bf16.msra.mxu0 0
    %492 = vmatprep.subr.bf16.mxu0 0
    %493 = vmatpush1.bf16.msra.mxu0 0
    %494 = vmatprep.subr.bf16.mxu0 0
    %495 = vmatpush1.bf16.msra.mxu0 0
    %496 = vmatprep.subr.bf16.mxu0 0
    %497 = vmatpush1.bf16.msra.mxu0 0
    %498 = vmatprep.subr.bf16.mxu0 0
    %499 = vmatpush1.bf16.msra.mxu0 0
    %500 = vmatprep.subr.bf16.mxu0 0
    %501 = vmatpush1.bf16.msra.mxu0 0
    %502 = vmatprep.subr.bf16.mxu0 0
    %503 = vmatpush1.bf16.msra.mxu0 0
    %504 = vmatprep.subr.bf16.mxu0 0
    %505 = vmatpush1.bf16.msra.mxu0 0
    %506 = vmatprep.mubr.bf16.mxu0 0
    %507 = vmatmul.mubr.bf16.gmra.mrb[0].mxu0 %v399
    %v508 = vpop.f32.mrb[0].mxu0
    %v509 = vadd.f32 %v424, %v508
    %v510 = vpop.f32.mrb[0].mxu0
    %v511 = vpop.f32.mrb[0].mxu0
    %v512 = vadd.f32 %v424, %v511
    %v513 = vpop.f32.mrb[0].mxu0
    %514 = vmatprep.mubr.bf16.mxu0 0
    %515 = vmatmul.mubr.bf16.gmra.mrb[0].mxu0 %v400
    %v516 = vpop.f32.mrb[0].mxu0
    %v517 = vadd.f32 %v424, %v516
    %v518 = vpop.f32.mrb[0].mxu0
    %v519 = vpop.f32.mrb[0].mxu0
    %v520 = vadd.f32 %v424, %v519
    %v521 = vpop.f32.mrb[0].mxu0
    %522 = vmatprep.mubr.bf16.mxu0 0
    %523 = vmatmul.mubr.bf16.gmra.mrb[0].mxu0 %v401
    %v524 = vpop.f32.mrb[0].mxu0
    %v525 = vadd.f32 %v424, %v524
    %v526 = vpop.f32.mrb[0].mxu0
    %v527 = vpop.f32.mrb[0].mxu0
    %v528 = vadd.f32 %v424, %v527
    %v529 = vpop.f32.mrb[0].mxu0
    %530 = vmatprep.mubr.bf16.mxu0 0
    %531 = vmatmul.mubr.bf16.gmra.mrb[0].mxu0 %v402
    %v532 = vpop.f32.mrb[0].mxu0
    %v533 = vadd.f32 %v424, %v532
    %v534 = vpop.f32.mrb[0].mxu0
    %v535 = vpop.f32.mrb[0].mxu0
    %v536 = vadd.f32 %v424, %v535
    %v537 = vpop.f32.mrb[0].mxu0
    %538 = vdwg.mxu0
    %v539 = vpack.c.bf16 %v512, %v509
    %v540 = vpack.c.bf16 %v520, %v517
    %v541 = vpack.c.bf16 %v528, %v525
    %v542 = vpack.c.bf16 %v536, %v533
    %v547 = vunpack.c.l.b16 %v539
    %v548 = vunpack.c.h.b16 %v539
    %v549 = vunpack.c.l.b16 %v540
    %v550 = vunpack.c.h.b16 %v540
    %v551 = vunpack.c.l.b16 %v541
    %v552 = vunpack.c.h.b16 %v541
    %v553 = vunpack.c.l.b16 %v542
    %v554 = vunpack.c.h.b16 %v542
    %v555 = vpack.c.b16 %v547, %v547
    %v556 = vpack.c.b16 %v548, %v548
    %v557 = vpack.c.b16 %v549, %v549
    %v558 = vpack.c.b16 %v550, %v550
    %v559 = vpack.c.b16 %v551, %v551
    %v560 = vpack.c.b16 %v552, %v552
    %v561 = vpack.c.b16 %v553, %v553
    %v562 = vpack.c.b16 %v554, %v554
    %571 = vst [vmem:[#allocation10] sm:$0xf] %v555
    %572 = vst [vmem:[#allocation10 + $0x4] sm:$0xf] %v556
    %573 = vst [vmem:[#allocation10 + $0x8] sm:$0xf] %v557
    %574 = vst [vmem:[#allocation10 + $0xc] sm:$0xf] %v558
    %575 = vst [vmem:[#allocation10 + $0x10] sm:$0xf] %v559
    %576 = vst [vmem:[#allocation10 + $0x14] sm:$0xf] %v560
    %577 = vst [vmem:[#allocation10 + $0x18] sm:$0xf] %v561
    %578 = vst [vmem:[#allocation10 + $0x1c] sm:$0xf] %v562
    // Predicated region
    $region46: #{tpu_custom_call.1} parent=1 // pred_check
      _
    $region47: #{tpu_custom_call.1} parent=1 // pred_check_branch
      %580 = sbr.rel (0) target = $region49
    $region48: #{tpu_custom_call.1} parent=1 // pred_region
      %s582 = ssub.s32 512, 512
      %583 = vsyncadd [#allocation4], %s582
      %s584 = sshll.u32 [#allocation10], 4
      %s585 = int_to_ptr.vmem [resolvable:$true] %s584
      %590 = dma.vmem_to_hbm [thread:$0]  %s585, 512, %s7, [#allocation4], 64, 64, 4
    $region49: #{tpu_custom_call.1} parent=1 // pred_fallthru
      _
    // Predicated region
    $region50: #{tpu_custom_call.1} parent=1 // pred_check
      _
    $region51: #{tpu_custom_call.1} parent=1 // pred_check_branch
      %592 = sbr.rel (0) target = $region53
    $region52: #{tpu_custom_call.1} parent=1 // pred_region
      %593 = dma.done [#allocation4], 512
    $region53: #{tpu_custom_call.1} parent=1 // pred_fallthru
      _
    %594 = vsyncpa [#allocation3], 1
    %595 = vsyncpa [#allocation6], 1
    %596 = vsyncpa [#allocation9], 1
    %597 = vsyncpa [#allocation4], 1

// kernel: tpu_custom_call.1
$region0: #{tpu_custom_call.1}
  #allocation0 [shape = 'u32[]', space=smem, size = 0x4, offset = 0x4, fixed_abs, tag = 'smem constant byte address 0x4 - core index']
  #allocation1 [shape = 'u32[144,128]{1,0:T(1,128)}', space=vmem, size = 0x12000, scoped, tag = 'internal scratch']
  %s0 = inlined_call_operand.hbm [shape: bf16[64,128], index: 0, kind: input, shape index: {}]
  %s1 = inlined_call_operand.hbm [shape: bf16[128,128], index: 1, kind: input, shape index: {}]
  %s2 = inlined_call_operand.vmem [shape: f32[1,128], index: 2, kind: input, shape index: {}]
  %s3 = inlined_call_operand.hbm [shape: bf16[128,128], index: 3, kind: input, shape index: {}]
  %s4 = inlined_call_operand.vmem [shape: f32[1,128], index: 4, kind: input, shape index: {}]
  %s5 = inlined_call_operand.hbm [shape: bf16[128,128], index: 5, kind: input, shape index: {}]
  %s6 = inlined_call_operand.vmem [shape: f32[1,128], index: 6, kind: input, shape index: {}]
  %s7 = inlined_call_operand.hbm [shape: bf16[64,128], index: 7, kind: output, shape index: {}]
  %s8 = sld [smem:[#allocation0]]
  $region54: #{tpu_custom_call.1} parent=0
    _
  %s10 = ssub.s32 1, %s8
  %s11 = scalar_select 0, %s10, %s8
  $region1: #{tpu_custom_call.1} parent=0
    #allocation2 [shape = 'u8[16384]{0}', space=vmem, size = 0x4000, scoped, tag = 'input window, operand 0, single buffered']
    #allocation3 [shape = 's32[1]{0}', space=sflag, size = 0x4, scoped, tag = 'scoped memory for tpu_custom_call.1']
    #allocation4 [shape = 's32[1]{0}', space=sflag, size = 0x4, scoped, tag = 'scoped memory for tpu_custom_call.1']
    #allocation5 [shape = 'u8[32768]{0}', space=vmem, size = 0x8000, scoped, tag = 'input window, operand 1, single buffered']
    #allocation6 [shape = 's32[1]{0}', space=sflag, size = 0x4, scoped, tag = 'scoped memory for tpu_custom_call.1']
    #allocation7 [shape = 'u8[32768]{0}', space=vmem, size = 0x8000, scoped, tag = 'input window, operand 3, single buffered']
    #allocation8 [shape = 'u8[32768]{0}', space=vmem, size = 0x8000, scoped, tag = 'input window, operand 5, single buffered']
    #allocation9 [shape = 's32[1]{0}', space=sflag, size = 0x4, scoped, tag = 'scoped memory for tpu_custom_call.1']
    #allocation10 [shape = 'u8[16384]{0}', space=vmem, size = 0x4000, scoped, tag = 'output window, operand 0, single buffered']
    %12 = vsyncpa [#allocation3], 0
    %13 = vsyncpa [#allocation6], 0
    %14 = vsyncpa [#allocation9], 0
    %15 = vsyncpa [#allocation4], 0
    // Predicated region
    $region2: #{tpu_custom_call.1} parent=1 // pred_check
      _
    $region3: #{tpu_custom_call.1} parent=1 // pred_check_branch
      %17 = sbr.rel (0) target = $region5
    $region4: #{tpu_custom_call.1} parent=1 // pred_region
      %s19 = ssub.s32 512, 512
      %20 = vsyncadd [#allocation3], %s19
      %s21 = sshll.u32 [#allocation2], 4
      %s22 = int_to_ptr.vmem [resolvable:$true] %s21
      %27 = dma.hbm_to_vmem [thread:$0]  %s0, 512, %s22, [#allocation3], 64, 64, 4
    $region5: #{tpu_custom_call.1} parent=1 // pred_fallthru
      _
    // Predicated region
    $region6: #{tpu_custom_call.1} parent=1 // pred_check
      _
    $region7: #{tpu_custom_call.1} parent=1 // pred_check_branch
      %29 = sbr.rel (0) target = $region9
    $region8: #{tpu_custom_call.1} parent=1 // pred_region
      %s31 = ssub.s32 1024, 1024
      %32 = vsyncadd [#allocation6], %s31
      %s33 = sshll.u32 [#allocation5], 4
      %s34 = int_to_ptr.vmem [resolvable:$true] %s33
      %39 = dma.hbm_to_vmem [thread:$0]  %s1, 1024, %s34, [#allocation6], 64, 64, 4
    $region9: #{tpu_custom_call.1} parent=1 // pred_fallthru
      _
    // Predicated region
    $region10: #{tpu_custom_call.1} parent=1 // pred_check
      _
    $region11: #{tpu_custom_call.1} parent=1 // pred_check_branch
      %41 = sbr.rel (0) target = $region13
    $region12: #{tpu_custom_call.1} parent=1 // pred_region
      _
    $region13: #{tpu_custom_call.1} parent=1 // pred_fallthru
      _
    // Predicated region
    $region14: #{tpu_custom_call.1} parent=1 // pred_check
      _
    $region15: #{tpu_custom_call.1} parent=1 // pred_check_branch
      %43 = sbr.rel (0) target = $region17
    $region16: #{tpu_custom_call.1} parent=1 // pred_region
      %s45 = ssub.s32 1024, 1024
      %46 = vsyncadd [#allocation6], %s45
      %s47 = sshll.u32 [#allocation7], 4
      %s48 = int_to_ptr.vmem [resolvable:$true] %s47
      %53 = dma.hbm_to_vmem [thread:$0]  %s3, 1024, %s48, [#allocation6], 64, 64, 4
    $region17: #{tpu_custom_call.1} parent=1 // pred_fallthru
      _
    // Predicated region
    $region18: #{tpu_custom_call.1} parent=1 // pred_check
      _
    $region19: #{tpu_custom_call.1} parent=1 // pred_check_branch
      %55 = sbr.rel (0) target = $region21
    $region20: #{tpu_custom_call.1} parent=1 // pred_region
      _
    $region21: #{tpu_custom_call.1} parent=1 // pred_fallthru
      _
    // Predicated region
    $region22: #{tpu_custom_call.1} parent=1 // pred_check
      _
    $region23: #{tpu_custom_call.1} parent=1 // pred_check_branch
      %57 = sbr.rel (0) target = $region25
    $region24: #{tpu_custom_call.1} parent=1 // pred_region
      %s59 = ssub.s32 1024, 1024
      %60 = vsyncadd [#allocation9], %s59
      %s61 = sshll.u32 [#allocation8], 4
      %s62 = int_to_ptr.vmem [resolvable:$true] %s61
      %67 = dma.hbm_to_vmem [thread:$0]  %s5, 1024, %s62, [#allocation9], 64, 64, 4
    $region25: #{tpu_custom_call.1} parent=1 // pred_fallthru
      _
    // Predicated region
    $region26: #{tpu_custom_call.1} parent=1 // pred_check
      _
    $region27: #{tpu_custom_call.1} parent=1 // pred_check_branch
      %69 = sbr.rel (0) target = $region29
    $region28: #{tpu_custom_call.1} parent=1 // pred_region
      _
    $region29: #{tpu_custom_call.1} parent=1 // pred_fallthru
      _
    // Predicated region
    $region30: #{tpu_custom_call.1} parent=1 // pred_check
      _
    $region31: #{tpu_custom_call.1} parent=1 // pred_check_branch
      %71 = sbr.rel (0) target = $region33
    $region32: #{tpu_custom_call.1} parent=1 // pred_region
      %72 = dma.done [#allocation3], 512
    $region33: #{tpu_custom_call.1} parent=1 // pred_fallthru
      _
    // Predicated region
    $region34: #{tpu_custom_call.1} parent=1 // pred_check
      _
    $region35: #{tpu_custom_call.1} parent=1 // pred_check_branch
      %74 = sbr.rel (0) target = $region37
    $region36: #{tpu_custom_call.1} parent=1 // pred_region
      %75 = dma.done [#allocation6], 1024
    $region37: #{tpu_custom_call.1} parent=1 // pred_fallthru
      _
    // Predicated region
    $region38: #{tpu_custom_call.1} parent=1 // pred_check
      _
    $region39: #{tpu_custom_call.1} parent=1 // pred_check_branch
      %77 = sbr.rel (0) target = $region41
    $region40: #{tpu_custom_call.1} parent=1 // pred_region
      %78 = dma.done [#allocation6], 1024
    $region41: #{tpu_custom_call.1} parent=1 // pred_fallthru
      _
    // Predicated region
    $region42: #{tpu_custom_call.1} parent=1 // pred_check
      _
    $region43: #{tpu_custom_call.1} parent=1 // pred_check_branch
      %80 = sbr.rel (0) target = $region45
    $region44: #{tpu_custom_call.1} parent=1 // pred_region
      %81 = dma.done [#allocation9], 1024
    $region45: #{tpu_custom_call.1} parent=1 // pred_fallthru
      _
    %v83 = vld [vmem:[#allocation2] sm:$0xf]
    %v84 = vld [vmem:[#allocation2 + $0x4] sm:$0xf]
    %v85 = vld [vmem:[#allocation2 + $0x8] sm:$0xf]
    %v86 = vld [vmem:[#allocation2 + $0xc] sm:$0xf]
    %v87 = vld [vmem:[#allocation2 + $0x10] sm:$0xf]
    %v88 = vld [vmem:[#allocation2 + $0x14] sm:$0xf]
    %v89 = vld [vmem:[#allocation2 + $0x18] sm:$0xf]
    %v90 = vld [vmem:[#allocation2 + $0x1c] sm:$0xf]
    %v91 = vld [vmem:[#allocation5] sm:$0xf]
    %v92 = vld [vmem:[#allocation5 + $0x4] sm:$0xf]
    %v93 = vld [vmem:[#allocation5 + $0x8] sm:$0xf]
    %v94 = vld [vmem:[#allocation5 + $0xc] sm:$0xf]
    %v95 = vld [vmem:[#allocation5 + $0x10] sm:$0xf]
    %v96 = vld [vmem:[#allocation5 + $0x14] sm:$0xf]
    %v97 = vld [vmem:[#allocation5 + $0x18] sm:$0xf]
    %v98 = vld [vmem:[#allocation5 + $0x1c] sm:$0xf]
    %v99 = vld [vmem:[#allocation5 + $0x20] sm:$0xf]
    %v100 = vld [vmem:[#allocation5 + $0x24] sm:$0xf]
    %v101 = vld [vmem:[#allocation5 + $0x28] sm:$0xf]
    %v102 = vld [vmem:[#allocation5 + $0x2c] sm:$0xf]
    %v103 = vld [vmem:[#allocation5 + $0x30] sm:$0xf]
    %v104 = vld [vmem:[#allocation5 + $0x34] sm:$0xf]
    %v105 = vld [vmem:[#allocation5 + $0x38] sm:$0xf]
    %v106 = vld [vmem:[#allocation5 + $0x3c] sm:$0xf]
    %v107 = vld [vmem:[%s2] sm:$0x1]
    %v109 = vlaneseq
    %v110 = vshrl.u32 %v109, 7
    %v111 = vsub.s32 0, %v110
    %v112 = vrot.slane %v107, %v111
    %v122 = vunpack.c.l.b16 %v83
    %v123 = vunpack.c.l.b16 %v84
    %v124 = vunpack.c.l.b16 %v85
    %v125 = vunpack.c.l.b16 %v86
    %v126 = vunpack.c.l.b16 %v87
    %v127 = vunpack.c.l.b16 %v88
    %v128 = vunpack.c.l.b16 %v89
    %v129 = vunpack.c.l.b16 %v90
    %v130 = vpack.c.b16 %v123, %v122
    %v131 = vpack.c.b16 %v125, %v124
    %v132 = vpack.c.b16 %v127, %v126
    %v133 = vpack.c.b16 %v129, %v128
    %v154 = vunpack.c.l.b16 %v91
    %v155 = vunpack.c.l.b16 %v92
    %v156 = vunpack.c.l.b16 %v93
    %v157 = vunpack.c.l.b16 %v94
    %v158 = vunpack.c.l.b16 %v95
    %v159 = vunpack.c.l.b16 %v96
    %v160 = vunpack.c.l.b16 %v97
    %v161 = vunpack.c.l.b16 %v98
    %v162 = vunpack.c.l.b16 %v99
    %v163 = vunpack.c.l.b16 %v100
    %v164 = vunpack.c.l.b16 %v101
    %v165 = vunpack.c.l.b16 %v102
    %v166 = vunpack.c.l.b16 %v103
    %v167 = vunpack.c.l.b16 %v104
    %v168 = vunpack.c.l.b16 %v105
    %v169 = vunpack.c.l.b16 %v106
    %v170 = vpack.c.b16 %v155, %v154
    %v171 = vpack.c.b16 %v157, %v156
    %v172 = vpack.c.b16 %v159, %v158
    %v173 = vpack.c.b16 %v161, %v160
    %v174 = vpack.c.b16 %v163, %v162
    %v175 = vpack.c.b16 %v165, %v164
    %v176 = vpack.c.b16 %v167, %v166
    %v177 = vpack.c.b16 %v169, %v168
    %186 = vmatprep.subr.bf16.mxu0 0
    %187 = vmatpush1.bf16.msra.mxu0 %v170
    %188 = vmatprep.subr.bf16.mxu0 0
    %189 = vmatpush1.bf16.msra.mxu0 %v171
    %190 = vmatprep.subr.bf16.mxu0 0
    %191 = vmatpush1.bf16.msra.mxu0 %v172
    %192 = vmatprep.subr.bf16.mxu0 0
    %193 = vmatpush1.bf16.msra.mxu0 %v173
    %194 = vmatprep.subr.bf16.mxu0 0
    %195 = vmatpush1.bf16.msra.mxu0 %v174
    %196 = vmatprep.subr.bf16.mxu0 0
    %197 = vmatpush1.bf16.msra.mxu0 %v175
    %198 = vmatprep.subr.bf16.mxu0 0
    %199 = vmatpush1.bf16.msra.mxu0 %v176
    %200 = vmatprep.subr.bf16.mxu0 0
    %201 = vmatpush1.bf16.msra.mxu0 %v177
    %202 = vmatprep.subr.bf16.mxu0 0
    %203 = vmatpush1.bf16.msra.mxu0 0
    %204 = vmatprep.subr.bf16.mxu0 0
    %205 = vmatpush1.bf16.msra.mxu0 0
    %206 = vmatprep.subr.bf16.mxu0 0
    %207 = vmatpush1.bf16.msra.mxu0 0
    %208 = vmatprep.subr.bf16.mxu0 0
    %209 = vmatpush1.bf16.msra.mxu0 0
    %210 = vmatprep.subr.bf16.mxu0 0
    %211 = vmatpush1.bf16.msra.mxu0 0
    %212 = vmatprep.subr.bf16.mxu0 0
    %213 = vmatpush1.bf16.msra.mxu0 0
    %214 = vmatprep.subr.bf16.mxu0 0
    %215 = vmatpush1.bf16.msra.mxu0 0
    %216 = vmatprep.subr.bf16.mxu0 0
    %217 = vmatpush1.bf16.msra.mxu0 0
    %218 = vmatprep.mubr.bf16.mxu0 0
    %219 = vmatmul.mubr.bf16.gmra.mrb[0].mxu0 %v130
    %v220 = vpop.f32.mrb[0].mxu0
    %v221 = vadd.f32 %v112, %v220
    %v222 = vpop.f32.mrb[0].mxu0
    %v223 = vpop.f32.mrb[0].mxu0
    %v224 = vadd.f32 %v112, %v223
    %v225 = vpop.f32.mrb[0].mxu0
    %226 = vmatprep.mubr.bf16.mxu0 0
    %227 = vmatmul.mubr.bf16.gmra.mrb[0].mxu0 %v131
    %v228 = vpop.f32.mrb[0].mxu0
    %v229 = vadd.f32 %v112, %v228
    %v230 = vpop.f32.mrb[0].mxu0
    %v231 = vpop.f32.mrb[0].mxu0
    %v232 = vadd.f32 %v112, %v231
    %v233 = vpop.f32.mrb[0].mxu0
    %234 = vmatprep.mubr.bf16.mxu0 0
    %235 = vmatmul.mubr.bf16.gmra.mrb[0].mxu0 %v132
    %v236 = vpop.f32.mrb[0].mxu0
    %v237 = vadd.f32 %v112, %v236
    %v238 = vpop.f32.mrb[0].mxu0
    %v239 = vpop.f32.mrb[0].mxu0
    %v240 = vadd.f32 %v112, %v239
    %v241 = vpop.f32.mrb[0].mxu0
    %242 = vmatprep.mubr.bf16.mxu0 0
    %243 = vmatmul.mubr.bf16.gmra.mrb[0].mxu0 %v133
    %v244 = vpop.f32.mrb[0].mxu0
    %v245 = vadd.f32 %v112, %v244
    %v246 = vpop.f32.mrb[0].mxu0
    %v247 = vpop.f32.mrb[0].mxu0
    %v248 = vadd.f32 %v112, %v247
    %v249 = vpop.f32.mrb[0].mxu0
    %250 = vdwg.mxu0
    %v251 = vpack.c.bf16 %v224, %v221
    %v252 = vpack.c.bf16 %v232, %v229
    %v253 = vpack.c.bf16 %v240, %v237
    %v254 = vpack.c.bf16 %v248, %v245
    %v255 = vmax.bf16 %v251, 0
    %v256 = vmax.bf16 %v252, 0
    %v257 = vmax.bf16 %v253, 0
    %v258 = vmax.bf16 %v254, 0
    %v259 = vld [vmem:[#allocation7] sm:$0xf]
    %v260 = vld [vmem:[#allocation7 + $0x4] sm:$0xf]
    %v261 = vld [vmem:[#allocation7 + $0x8] sm:$0xf]
    %v262 = vld [vmem:[#allocation7 + $0xc] sm:$0xf]
    %v263 = vld [vmem:[#allocation7 + $0x10] sm:$0xf]
    %v264 = vld [vmem:[#allocation7 + $0x14] sm:$0xf]
    %v265 = vld [vmem:[#allocation7 + $0x18] sm:$0xf]
    %v266 = vld [vmem:[#allocation7 + $0x1c] sm:$0xf]
    %v267 = vld [vmem:[#allocation7 + $0x20] sm:$0xf]
    %v268 = vld [vmem:[#allocation7 + $0x24] sm:$0xf]
    %v269 = vld [vmem:[#allocation7 + $0x28] sm:$0xf]
    %v270 = vld [vmem:[#allocation7 + $0x2c] sm:$0xf]
    %v271 = vld [vmem:[#allocation7 + $0x30] sm:$0xf]
    %v272 = vld [vmem:[#allocation7 + $0x34] sm:$0xf]
    %v273 = vld [vmem:[#allocation7 + $0x38] sm:$0xf]
    %v274 = vld [vmem:[#allocation7 + $0x3c] sm:$0xf]
    %v275 = vld [vmem:[%s4] sm:$0x1]
    %v277 = vlaneseq
    %v278 = vshrl.u32 %v277, 7
    %v279 = vsub.s32 0, %v278
    %v280 = vrot.slane %v275, %v279
    %v298 = vunpack.c.l.b16 %v259
    %v299 = vunpack.c.l.b16 %v260
    %v300 = vunpack.c.l.b16 %v261
    %v301 = vunpack.c.l.b16 %v262
    %v302 = vunpack.c.l.b16 %v263
    %v303 = vunpack.c.l.b16 %v264
    %v304 = vunpack.c.l.b16 %v265
    %v305 = vunpack.c.l.b16 %v266
    %v306 = vunpack.c.l.b16 %v267
    %v307 = vunpack.c.l.b16 %v268
    %v308 = vunpack.c.l.b16 %v269
    %v309 = vunpack.c.l.b16 %v270
    %v310 = vunpack.c.l.b16 %v271
    %v311 = vunpack.c.l.b16 %v272
    %v312 = vunpack.c.l.b16 %v273
    %v313 = vunpack.c.l.b16 %v274
    %v314 = vpack.c.b16 %v299, %v298
    %v315 = vpack.c.b16 %v301, %v300
    %v316 = vpack.c.b16 %v303, %v302
    %v317 = vpack.c.b16 %v305, %v304
    %v318 = vpack.c.b16 %v307, %v306
    %v319 = vpack.c.b16 %v309, %v308
    %v320 = vpack.c.b16 %v311, %v310
    %v321 = vpack.c.b16 %v313, %v312
    %330 = vmatprep.subr.bf16.mxu0 0
    %331 = vmatpush1.bf16.msra.mxu0 %v314
    %332 = vmatprep.subr.bf16.mxu0 0
    %333 = vmatpush1.bf16.msra.mxu0 %v315
    %334 = vmatprep.subr.bf16.mxu0 0
    %335 = vmatpush1.bf16.msra.mxu0 %v316
    %336 = vmatprep.subr.bf16.mxu0 0
    %337 = vmatpush1.bf16.msra.mxu0 %v317
    %338 = vmatprep.subr.bf16.mxu0 0
    %339 = vmatpush1.bf16.msra.mxu0 %v318
    %340 = vmatprep.subr.bf16.mxu0 0
    %341 = vmatpush1.bf16.msra.mxu0 %v319
    %342 = vmatprep.subr.bf16.mxu0 0
    %343 = vmatpush1.bf16.msra.mxu0 %v320
    %344 = vmatprep.subr.bf16.mxu0 0
    %345 = vmatpush1.bf16.msra.mxu0 %v321
    %346 = vmatprep.subr.bf16.mxu0 0
    %347 = vmatpush1.bf16.msra.mxu0 0
    %348 = vmatprep.subr.bf16.mxu0 0
    %349 = vmatpush1.bf16.msra.mxu0 0
    %350 = vmatprep.subr.bf16.mxu0 0
    %351 = vmatpush1.bf16.msra.mxu0 0
    %352 = vmatprep.subr.bf16.mxu0 0
    %353 = vmatpush1.bf16.msra.mxu0 0
    %354 = vmatprep.subr.bf16.mxu0 0
    %355 = vmatpush1.bf16.msra.mxu0 0
    %356 = vmatprep.subr.bf16.mxu0 0
    %357 = vmatpush1.bf16.msra.mxu0 0
    %358 = vmatprep.subr.bf16.mxu0 0
    %359 = vmatpush1.bf16.msra.mxu0 0
    %360 = vmatprep.subr.bf16.mxu0 0
    %361 = vmatpush1.bf16.msra.mxu0 0
    %362 = vmatprep.mubr.bf16.mxu0 0
    %363 = vmatmul.mubr.bf16.gmra.mrb[0].mxu0 %v255
    %v364 = vpop.f32.mrb[0].mxu0
    %v365 = vadd.f32 %v280, %v364
    %v366 = vpop.f32.mrb[0].mxu0
    %v367 = vpop.f32.mrb[0].mxu0
    %v368 = vadd.f32 %v280, %v367
    %v369 = vpop.f32.mrb[0].mxu0
    %370 = vmatprep.mubr.bf16.mxu0 0
    %371 = vmatmul.mubr.bf16.gmra.mrb[0].mxu0 %v256
    %v372 = vpop.f32.mrb[0].mxu0
    %v373 = vadd.f32 %v280, %v372
    %v374 = vpop.f32.mrb[0].mxu0
    %v375 = vpop.f32.mrb[0].mxu0
    %v376 = vadd.f32 %v280, %v375
    %v377 = vpop.f32.mrb[0].mxu0
    %378 = vmatprep.mubr.bf16.mxu0 0
    %379 = vmatmul.mubr.bf16.gmra.mrb[0].mxu0 %v257
    %v380 = vpop.f32.mrb[0].mxu0
    %v381 = vadd.f32 %v280, %v380
    %v382 = vpop.f32.mrb[0].mxu0
    %v383 = vpop.f32.mrb[0].mxu0
    %v384 = vadd.f32 %v280, %v383
    %v385 = vpop.f32.mrb[0].mxu0
    %386 = vmatprep.mubr.bf16.mxu0 0
    %387 = vmatmul.mubr.bf16.gmra.mrb[0].mxu0 %v258
    %v388 = vpop.f32.mrb[0].mxu0
    %v389 = vadd.f32 %v280, %v388
    %v390 = vpop.f32.mrb[0].mxu0
    %v391 = vpop.f32.mrb[0].mxu0
    %v392 = vadd.f32 %v280, %v391
    %v393 = vpop.f32.mrb[0].mxu0
    %394 = vdwg.mxu0
    %v395 = vpack.c.bf16 %v368, %v365
    %v396 = vpack.c.bf16 %v376, %v373
    %v397 = vpack.c.bf16 %v384, %v381
    %v398 = vpack.c.bf16 %v392, %v389
    %v399 = vmax.bf16 %v395, 0
    %v400 = vmax.bf16 %v396, 0
    %v401 = vmax.bf16 %v397, 0
    %v402 = vmax.bf16 %v398, 0
    %v403 = vld [vmem:[#allocation8] sm:$0xf]
    %v404 = vld [vmem:[#allocation8 + $0x4] sm:$0xf]
    %v405 = vld [vmem:[#allocation8 + $0x8] sm:$0xf]
    %v406 = vld [vmem:[#allocation8 + $0xc] sm:$0xf]
    %v407 = vld [vmem:[#allocation8 + $0x10] sm:$0xf]
    %v408 = vld [vmem:[#allocation8 + $0x14] sm:$0xf]
    %v409 = vld [vmem:[#allocation8 + $0x18] sm:$0xf]
    %v410 = vld [vmem:[#allocation8 + $0x1c] sm:$0xf]
    %v411 = vld [vmem:[#allocation8 + $0x20] sm:$0xf]
    %v412 = vld [vmem:[#allocation8 + $0x24] sm:$0xf]
    %v413 = vld [vmem:[#allocation8 + $0x28] sm:$0xf]
    %v414 = vld [vmem:[#allocation8 + $0x2c] sm:$0xf]
    %v415 = vld [vmem:[#allocation8 + $0x30] sm:$0xf]
    %v416 = vld [vmem:[#allocation8 + $0x34] sm:$0xf]
    %v417 = vld [vmem:[#allocation8 + $0x38] sm:$0xf]
    %v418 = vld [vmem:[#allocation8 + $0x3c] sm:$0xf]
    %v419 = vld [vmem:[%s6] sm:$0x1]
    %v421 = vlaneseq
    %v422 = vshrl.u32 %v421, 7
    %v423 = vsub.s32 0, %v422
    %v424 = vrot.slane %v419, %v423
    %v442 = vunpack.c.l.b16 %v403
    %v443 = vunpack.c.l.b16 %v404
    %v444 = vunpack.c.l.b16 %v405
    %v445 = vunpack.c.l.b16 %v406
    %v446 = vunpack.c.l.b16 %v407
    %v447 = vunpack.c.l.b16 %v408
    %v448 = vunpack.c.l.b16 %v409
    %v449 = vunpack.c.l.b16 %v410
    %v450 = vunpack.c.l.b16 %v411
    %v451 = vunpack.c.l.b16 %v412
    %v452 = vunpack.c.l.b16 %v413
    %v453 = vunpack.c.l.b16 %v414
    %v454 = vunpack.c.l.b16 %v415
    %v455 = vunpack.c.l.b16 %v416
    %v456 = vunpack.c.l.b16 %v417
    %v457 = vunpack.c.l.b16 %v418
    %v458 = vpack.c.b16 %v443, %v442
    %v459 = vpack.c.b16 %v445, %v444
    %v460 = vpack.c.b16 %v447, %v446
    %v461 = vpack.c.b16 %v449, %v448
    %v462 = vpack.c.b16 %v451, %v450
    %v463 = vpack.c.b16 %v453, %v452
    %v464 = vpack.c.b16 %v455, %v454
    %v465 = vpack.c.b16 %v457, %v456
    %474 = vmatprep.subr.bf16.mxu0 0
    %475 = vmatpush1.bf16.msra.mxu0 %v458
    %476 = vmatprep.subr.bf16.mxu0 0
    %477 = vmatpush1.bf16.msra.mxu0 %v459
    %478 = vmatprep.subr.bf16.mxu0 0
    %479 = vmatpush1.bf16.msra.mxu0 %v460
    %480 = vmatprep.subr.bf16.mxu0 0
    %481 = vmatpush1.bf16.msra.mxu0 %v461
    %482 = vmatprep.subr.bf16.mxu0 0
    %483 = vmatpush1.bf16.msra.mxu0 %v462
    %484 = vmatprep.subr.bf16.mxu0 0
    %485 = vmatpush1.bf16.msra.mxu0 %v463
    %486 = vmatprep.subr.bf16.mxu0 0
    %487 = vmatpush1.bf16.msra.mxu0 %v464
    %488 = vmatprep.subr.bf16.mxu0 0
    %489 = vmatpush1.bf16.msra.mxu0 %v465
    %490 = vmatprep.subr.bf16.mxu0 0
    %491 = vmatpush1.bf16.msra.mxu0 0
    %492 = vmatprep.subr.bf16.mxu0 0
    %493 = vmatpush1.bf16.msra.mxu0 0
    %494 = vmatprep.subr.bf16.mxu0 0
    %495 = vmatpush1.bf16.msra.mxu0 0
    %496 = vmatprep.subr.bf16.mxu0 0
    %497 = vmatpush1.bf16.msra.mxu0 0
    %498 = vmatprep.subr.bf16.mxu0 0
    %499 = vmatpush1.bf16.msra.mxu0 0
    %500 = vmatprep.subr.bf16.mxu0 0
    %501 = vmatpush1.bf16.msra.mxu0 0
    %502 = vmatprep.subr.bf16.mxu0 0
    %503 = vmatpush1.bf16.msra.mxu0 0
    %504 = vmatprep.subr.bf16.mxu0 0
    %505 = vmatpush1.bf16.msra.mxu0 0
    %506 = vmatprep.mubr.bf16.mxu0 0
    %507 = vmatmul.mubr.bf16.gmra.mrb[0].mxu0 %v399
    %v508 = vpop.f32.mrb[0].mxu0
    %v509 = vadd.f32 %v424, %v508
    %v510 = vpop.f32.mrb[0].mxu0
    %v511 = vpop.f32.mrb[0].mxu0
    %v512 = vadd.f32 %v424, %v511
    %v513 = vpop.f32.mrb[0].mxu0
    %514 = vmatprep.mubr.bf16.mxu0 0
    %515 = vmatmul.mubr.bf16.gmra.mrb[0].mxu0 %v400
    %v516 = vpop.f32.mrb[0].mxu0
    %v517 = vadd.f32 %v424, %v516
    %v518 = vpop.f32.mrb[0].mxu0
    %v519 = vpop.f32.mrb[0].mxu0
    %v520 = vadd.f32 %v424, %v519
    %v521 = vpop.f32.mrb[0].mxu0
    %522 = vmatprep.mubr.bf16.mxu0 0
    %523 = vmatmul.mubr.bf16.gmra.mrb[0].mxu0 %v401
    %v524 = vpop.f32.mrb[0].mxu0
    %v525 = vadd.f32 %v424, %v524
    %v526 = vpop.f32.mrb[0].mxu0
    %v527 = vpop.f32.mrb[0].mxu0
    %v528 = vadd.f32 %v424, %v527
    %v529 = vpop.f32.mrb[0].mxu0
    %530 = vmatprep.mubr.bf16.mxu0 0
    %531 = vmatmul.mubr.bf16.gmra.mrb[0].mxu0 %v402
    %v532 = vpop.f32.mrb[0].mxu0
    %v533 = vadd.f32 %v424, %v532
    %v534 = vpop.f32.mrb[0].mxu0
    %v535 = vpop.f32.mrb[0].mxu0
    %v536 = vadd.f32 %v424, %v535
    %v537 = vpop.f32.mrb[0].mxu0
    %538 = vdwg.mxu0
    %v539 = vpack.c.bf16 %v512, %v509
    %v540 = vpack.c.bf16 %v520, %v517
    %v541 = vpack.c.bf16 %v528, %v525
    %v542 = vpack.c.bf16 %v536, %v533
    %v547 = vunpack.c.l.b16 %v539
    %v548 = vunpack.c.h.b16 %v539
    %v549 = vunpack.c.l.b16 %v540
    %v550 = vunpack.c.h.b16 %v540
    %v551 = vunpack.c.l.b16 %v541
    %v552 = vunpack.c.h.b16 %v541
    %v553 = vunpack.c.l.b16 %v542
    %v554 = vunpack.c.h.b16 %v542
    %v555 = vpack.c.b16 %v547, %v547
    %v556 = vpack.c.b16 %v548, %v548
    %v557 = vpack.c.b16 %v549, %v549
    %v558 = vpack.c.b16 %v550, %v550
    %v559 = vpack.c.b16 %v551, %v551
    %v560 = vpack.c.b16 %v552, %v552
    %v561 = vpack.c.b16 %v553, %v553
    %v562 = vpack.c.b16 %v554, %v554
    %571 = vst [vmem:[#allocation10] sm:$0xf] %v555
    %572 = vst [vmem:[#allocation10 + $0x4] sm:$0xf] %v556
    %573 = vst [vmem:[#allocation10 + $0x8] sm:$0xf] %v557
    %574 = vst [vmem:[#allocation10 + $0xc] sm:$0xf] %v558
    %575 = vst [vmem:[#allocation10 + $0x10] sm:$0xf] %v559
    %576 = vst [vmem:[#allocation10 + $0x14] sm:$0xf] %v560
    %577 = vst [vmem:[#allocation10 + $0x18] sm:$0xf] %v561
    %578 = vst [vmem:[#allocation10 + $0x1c] sm:$0xf] %v562
    // Predicated region
    $region46: #{tpu_custom_call.1} parent=1 // pred_check
      _
    $region47: #{tpu_custom_call.1} parent=1 // pred_check_branch
      %580 = sbr.rel (0) target = $region49
    $region48: #{tpu_custom_call.1} parent=1 // pred_region
      %s582 = ssub.s32 512, 512
      %583 = vsyncadd [#allocation4], %s582
      %s584 = sshll.u32 [#allocation10], 4
      %s585 = int_to_ptr.vmem [resolvable:$true] %s584
      %590 = dma.vmem_to_hbm [thread:$0]  %s585, 512, %s7, [#allocation4], 64, 64, 4
    $region49: #{tpu_custom_call.1} parent=1 // pred_fallthru
      _
    // Predicated region
    $region50: #{tpu_custom_call.1} parent=1 // pred_check
      _
    $region51: #{tpu_custom_call.1} parent=1 // pred_check_branch
      %592 = sbr.rel (0) target = $region53
    $region52: #{tpu_custom_call.1} parent=1 // pred_region
      %593 = dma.done [#allocation4], 512
    $region53: #{tpu_custom_call.1} parent=1 // pred_fallthru
      _
    %594 = vsyncpa [#allocation3], 1
    %595 = vsyncpa [#allocation6], 1
    %596 = vsyncpa [#allocation9], 1
    %597 = vsyncpa [#allocation4], 1

</llo_original>
